<compile_context>
chip_gen: v5e
topology: v5e:2x2
jax: 0.10.0
libtpu: 0.0.40
codegen_flags: <defaults>
</compile_context>

<pallas_src>
import functools

import jax
import jax.numpy as jnp
from jax.experimental import pallas as pl
from jax.experimental.pallas import tpu as pltpu

BN_EPS = 1e-5
FEAT = 561            # input/output feature width of the MAE


def _round_up(x, m):
    return (x + m - 1) // m * m


# ----------------------------------------------------------------------------
# Kernel: one GEMM (all six Linear+BN layers pre-composed) + bias add.
# ----------------------------------------------------------------------------
def mae_kernel(x_ref, w_ref, b_ref, o_ref):
    x = x_ref[...]                                     # (tb, 561)
    # Single cast at entry (no-op when x already matches the weight dtype);
    # bf16 (or f32) operands with f32 accumulation on the MXU.
    acc = jnp.dot(x.astype(w_ref.dtype), w_ref[...],
                  preferred_element_type=jnp.float32)  # (tb, 561) f32
    o_ref[...] = (acc + b_ref[...]).astype(o_ref.dtype)


# ----------------------------------------------------------------------------
# Host-side parameter preparation (done once): BN fold + affine composition.
# ----------------------------------------------------------------------------
def fuse_params(linears, bns, compute_dtype=jnp.bfloat16):
    """Fold eval-mode BN into the adjacent Linear and compose the purely
    affine 6-layer chain into a single (561, 561) weight + (1, 561) bias.

    Composition is done in f32; only the final fused weight is cast to the
    compute dtype (bias stays f32 for the f32 accumulator add)."""
    w_tot, b_tot = None, None
    for i, (w, b) in enumerate(linears):
        if i < len(bns):                       # BN_k follows Linear_k, k = 0..4
            gamma, beta, mean, var = bns[i]
            s = gamma * jax.lax.rsqrt(var + BN_EPS)
            w = w * s
            b = (b - mean) * s + beta
        if w_tot is None:
            w_tot, b_tot = w, b
        else:                                  # (x@Wt+bt)@W + b
            w_tot = w_tot @ w
            b_tot = b_tot @ w + b
    return w_tot.astype(compute_dtype), b_tot.astype(jnp.float32)


# ----------------------------------------------------------------------------
# Wrapper: batch-tiled pallas_call, resident weights, no pad/slice passes.
# ----------------------------------------------------------------------------
@functools.partial(jax.jit, static_argnames=("tile_b",))
def mae_forward(x, w_tot, b_tot, tile_b=512):
    B, F = x.shape
    assert F == FEAT, F
    assert w_tot.shape == (FEAT, FEAT) and b_tot.shape == (1, FEAT)

    tb = min(tile_b, _round_up(B, 8))          # sublane-aligned batch tile
    # v7x megacore: avoid a 2-3 step grid (one TC idle / no pipelining).  The
    # ragged final tile is masked, so shrinking tb never adds HBM traffic.
    if pl.cdiv(B, tb) in (2, 3):
        tb = max(8, _round_up(pl.cdiv(B, 4), 8))
    grid = (pl.cdiv(B, tb),)

    return pl.pallas_call(
        mae_kernel,
        out_shape=jax.ShapeDtypeStruct((B, FEAT), x.dtype),
        grid=grid,
        in_specs=[
            pl.BlockSpec((tb, FEAT), lambda i: (i, 0)),      # x tile
            pl.BlockSpec((FEAT, FEAT), lambda i: (0, 0)),    # W_total (resident)
            pl.BlockSpec((1, FEAT), lambda i: (0, 0)),       # b_total (resident)
        ],
        out_specs=pl.BlockSpec((tb, FEAT), lambda i: (i, 0)),
        compiler_params=pltpu.CompilerParams(
            dimension_semantics=("parallel",),   # shard batch across TCs (v7x)
            vmem_limit_bytes=32 << 20,           # tb up to ~1024 f32 fits easily
        ),
    )(x, w_tot, b_tot)


# ----------------------------------------------------------------------------
# Deterministic params + pure-JAX reference (unfused, eval-mode semantics).
# ----------------------------------------------------------------------------
def init_params(key):
    dims_linear = [  # (in, out) for each nn.Linear, in forward order
        (561, 256), (256, 64), (64, 32),   # encoder
        (32, 64), (64, 256), (256, 561),   # decoder
    ]
    bn_dims = [256, 64, 32, 64, 256]       # BN layers in forward order

    keys = jax.random.split(key, len(dims_linear) * 2 + len(bn_dims) * 4)
    ki = iter(range(len(keys)))

    linears = []
    for (fan_in, fan_out) in dims_linear:
        bound = 1.0 / jnp.sqrt(fan_in)
        w = jax.random.uniform(keys[next(ki)], (fan_in, fan_out),
                               jnp.float32, -bound, bound)   # stored (in, out)
        b = jax.random.uniform(keys[next(ki)], (1, fan_out),
                               jnp.float32, -bound, bound)
        linears.append((w, b))

    bns = []
    for n in bn_dims:
        gamma = 1.0 + 0.1 * jax.random.normal(keys[next(ki)], (1, n), jnp.float32)
        beta = 0.1 * jax.random.normal(keys[next(ki)], (1, n), jnp.float32)
        rmean = 0.1 * jax.random.normal(keys[next(ki)], (1, n), jnp.float32)
        rvar = jax.random.uniform(keys[next(ki)], (1, n), jnp.float32, 0.5, 1.5)
        bns.append((gamma, beta, rmean, rvar))

    return linears, bns


def mae_reference(x, linears, bns):
    """Layer-by-layer eval-mode forward (BN uses running stats, Dropout=id)."""
    def bn(h, g, b, m, v):
        return (h - m) / jnp.sqrt(v + BN_EPS) * g + b

    h = x
    for i, (w, b) in enumerate(linears):
        h = h @ w + b
        if i < len(bns):
            g, be, m, v = bns[i]
            h = bn(h, g, be, m, v)
    return h


if __name__ == "__main__":
    key = jax.random.PRNGKey(0)
    k_params, k_x1, k_x2, k_x3 = jax.random.split(key, 4)

    linears, bns = init_params(k_params)

    # --- Test 1: small batch, f32 weights/activations, strict check. --------
    B1 = 8
    x1 = jax.random.normal(k_x1, (B1, FEAT), jnp.float32)
    ref1 = mae_reference(x1, linears, bns)
    w32, b32 = fuse_params(linears, bns, jnp.float32)
    out1 = jax.block_until_ready(mae_forward(x1, w32, b32))
    assert out1.shape == (B1, FEAT), out1.shape
    assert jnp.allclose(out1, ref1, atol=1e-3, rtol=1e-3), \
        float(jnp.max(jnp.abs(out1 - ref1)))

    # --- Test 2: ragged batch (masked final tile), bf16 end-to-end (default).
    wbf, bbf = fuse_params(linears, bns)               # bf16 weights (default)
    B2 = 50
    x2 = jax.random.normal(k_x2, (B2, FEAT), jnp.float32)
    ref2 = mae_reference(x2, linears, bns)
    out2 = jax.block_until_ready(mae_forward(x2.astype(jnp.bfloat16), wbf, bbf))
    assert out2.shape == (B2, FEAT) and out2.dtype == jnp.bfloat16
    err2 = float(jnp.max(jnp.abs(out2.astype(jnp.float32) - ref2)))
    assert err2 < 0.1, err2

    # --- Test 3: larger batch -> multi-step pipelined / megacore grid. ------
    B3 = 1024
    x3 = jax.random.normal(k_x3, (B3, FEAT), jnp.float32)
    ref3 = mae_reference(x3, linears, bns)
    out3 = jax.block_until_ready(mae_forward(x3.astype(jnp.bfloat16), wbf, bbf))
    assert out3.shape == (B3, FEAT)
    err3 = float(jnp.max(jnp.abs(out3.astype(jnp.float32) - ref3)))
    assert err3 < 0.1, err3

    print("KERNEL_OK")
</pallas_src>

<mosaic_0001>
module attributes {stable_mosaic.version = 11 : i64} {
  func.func @mae_kernel(%arg0: i32, %arg1: memref<8x561xf32, #tpu.memory_space<vmem>>, %arg2: memref<561x561xf32, #tpu.memory_space<vmem>>, %arg3: memref<1x561xf32, #tpu.memory_space<vmem>>, %arg4: memref<8x561xf32, #tpu.memory_space<vmem>>) attributes {dimension_semantics = [#tpu.dimension_semantics<parallel>], iteration_bounds = array<i64: 1>, scalar_prefetch = 0 : i64, scratch_operands = 0 : i64, tpu.core_type = #tpu.core_type<tc>, window_params = [{transform_indices = @transform_0, window_bounds = array<i64: 8, 561>}, {pipeline_mode = #tpu.pipeline_mode<synchronous>, transform_indices = @transform_1, window_bounds = array<i64: 561, 561>}, {pipeline_mode = #tpu.pipeline_mode<synchronous>, transform_indices = @transform_2, window_bounds = array<i64: 1, 561>}, {transform_indices = @transform_3, window_bounds = array<i64: 8, 561>}]} {
    %c0 = arith.constant 0 : index
    %c0_0 = arith.constant 0 : index
    %0 = vector.load %arg1[%c0, %c0_0] : memref<8x561xf32, #tpu.memory_space<vmem>>, vector<8x561xf32>
    %c0_1 = arith.constant 0 : index
    %c0_2 = arith.constant 0 : index
    %1 = vector.load %arg2[%c0_1, %c0_2] : memref<561x561xf32, #tpu.memory_space<vmem>>, vector<561x561xf32>
    %cst = arith.constant dense<0.000000e+00> : vector<8x561xf32>
    %2 = tpu.matmul %0, %1, %cst {dimension_numbers = #tpu.dot_dimension_numbers<[1], [0], [0], [1], [0, 0, 1, 1], [], []>} : vector<8x561xf32>, vector<561x561xf32>, vector<8x561xf32> -> vector<8x561xf32>
    %c0_3 = arith.constant 0 : index
    %c0_4 = arith.constant 0 : index
    %3 = vector.load %arg3[%c0_3, %c0_4] : memref<1x561xf32, #tpu.memory_space<vmem>>, vector<1x561xf32>
    %4 = vector.broadcast %3 : vector<1x561xf32> to vector<8x561xf32>
    %5 = arith.addf %2, %4 : vector<8x561xf32>
    %c0_5 = arith.constant 0 : index
    %c0_6 = arith.constant 0 : index
    %6 = vector.load %arg4[%c0_5, %c0_6] : memref<8x561xf32, #tpu.memory_space<vmem>>, vector<8x561xf32>
    tpu.vector_store %arg4[%c0_5, %c0_6], %5 {strides = array<i32>} : memref<8x561xf32, #tpu.memory_space<vmem>>, vector<8x561xf32>,
    return
  }
  func.func @transform_0(%arg0: i32) -> (i32, i32) {
    %c0_i32 = arith.constant 0 : i32
    %c0_i32_0 = arith.constant 0 : i32
    return %arg0, %c0_i32 : i32, i32
  }
  func.func @transform_1(%arg0: i32) -> (i32, i32) {
    %c0_i32 = arith.constant 0 : i32
    %c0_i32_0 = arith.constant 0 : i32
    %c0_i32_1 = arith.constant 0 : i32
    return %c0_i32, %c0_i32_0 : i32, i32
  }
  func.func @transform_2(%arg0: i32) -> (i32, i32) {
    %c0_i32 = arith.constant 0 : i32
    %c0_i32_0 = arith.constant 0 : i32
    %c0_i32_1 = arith.constant 0 : i32
    return %c0_i32, %c0_i32_0 : i32, i32
  }
  func.func @transform_3(%arg0: i32) -> (i32, i32) {
    %c0_i32 = arith.constant 0 : i32
    %c0_i32_0 = arith.constant 0 : i32
    return %arg0, %c0_i32 : i32, i32
  }
}

</mosaic_0001>

<llo_original>
// kernel: mae_forward.1
$region0: #{mae_forward.1}
  #allocation0 [shape = 'u32[]', space=smem, size = 0x4, offset = 0x4, fixed_abs, tag = 'smem constant byte address 0x4 - core index']
  #allocation1 [shape = 'u32[72,128]{1,0:T(1,128)}', space=vmem, size = 0x9000, scoped, tag = 'internal scratch']
  %s0 = inlined_call_operand.hbm [shape: f32[8,561], index: 0, kind: input, shape index: {}]
  %s1 = inlined_call_operand.hbm [shape: f32[561,561], index: 1, kind: input, shape index: {}]
  %s2 = inlined_call_operand.hbm [shape: f32[1,561], index: 2, kind: input, shape index: {}]
  %s3 = inlined_call_operand.hbm [shape: f32[8,561], index: 3, kind: output, shape index: {}]
  %s4 = sld [smem:[#allocation0]]
  $region34: #{mae_forward.1} parent=0
    _
  %s6 = ssub.s32 1, %s4
  %s7 = scalar_select 0, %s6, %s4
  $region1: #{mae_forward.1} parent=0
    #allocation2 [shape = 'u8[20480]{0}', space=vmem, size = 0x5000, scoped, tag = 'input window, operand 0, single buffered']
    #allocation3 [shape = 's32[1]{0}', space=sflag, size = 0x4, scoped, tag = 'scoped memory for mae_forward.1']
    #allocation4 [shape = 's32[1]{0}', space=sflag, size = 0x4, scoped, tag = 'scoped memory for mae_forward.1']
    #allocation5 [shape = 'u8[1454080]{0}', space=vmem, size = 0x163000, scoped, tag = 'input window, operand 1, single buffered']
    #allocation6 [shape = 's32[1]{0}', space=sflag, size = 0x4, scoped, tag = 'scoped memory for mae_forward.1']
    #allocation7 [shape = 'u8[2560]{0}', space=vmem, size = 0xc00, scoped, tag = 'input window, operand 2, single buffered']
    #allocation8 [shape = 'u8[20480]{0}', space=vmem, size = 0x5000, scoped, tag = 'output window, operand 0, single buffered']
    %8 = vsyncpa [#allocation3], 0
    %9 = vsyncpa [#allocation6], 0
    %10 = vsyncpa [#allocation4], 0
    // Predicated region
    $region2: #{mae_forward.1} parent=1 // pred_check
      _
    $region3: #{mae_forward.1} parent=1 // pred_check_branch
      %12 = sbr.rel (0) target = $region5
    $region4: #{mae_forward.1} parent=1 // pred_region
      %14 = vsyncadd [#allocation3], 0
      %s16 = sshll.u32 %s0, 4
      %s17 = int_to_ptr.hbm [resolvable:$true] %s16
      %s18 = sshll.u32 [#allocation2], 4
      %s19 = int_to_ptr.vmem [resolvable:$true] %s18
      %21 = dma.hbm_to_vmem [thread:$0]  %s17, 640, %s19, [#allocation3]
    $region5: #{mae_forward.1} parent=1 // pred_fallthru
      _
    // Predicated region
    $region6: #{mae_forward.1} parent=1 // pred_check
      _
    $region7: #{mae_forward.1} parent=1 // pred_check_branch
      %23 = sbr.rel (0) target = $region9
    $region8: #{mae_forward.1} parent=1 // pred_region
      %25 = vsyncadd [#allocation6], 0
      %s26 = sshll.u32 %s1, 4
      %s27 = int_to_ptr.hbm [resolvable:$true] %s26
      %s28 = sshll.u32 [#allocation5], 4
      %s29 = int_to_ptr.vmem [resolvable:$true] %s28
      %34 = dma.hbm_to_vmem [thread:$0]  %s27, 45440, %s29, [#allocation6], 640, 640, 40
    $region9: #{mae_forward.1} parent=1 // pred_fallthru
      _
    // Predicated region
    $region10: #{mae_forward.1} parent=1 // pred_check
      _
    $region11: #{mae_forward.1} parent=1 // pred_check_branch
      %36 = sbr.rel (0) target = $region13
    $region12: #{mae_forward.1} parent=1 // pred_region
      %38 = vsyncadd [#allocation6], 0
      %s40 = sshll.u32 %s2, 4
      %s41 = int_to_ptr.hbm [resolvable:$true] %s40
      %s42 = sshll.u32 [#allocation7], 4
      %s43 = int_to_ptr.vmem [resolvable:$true] %s42
      %45 = dma.hbm_to_vmem [thread:$0]  %s41, 80, %s43, [#allocation6]
    $region13: #{mae_forward.1} parent=1 // pred_fallthru
      _
    // Predicated region
    $region14: #{mae_forward.1} parent=1 // pred_check
      _
    $region15: #{mae_forward.1} parent=1 // pred_check_branch
      %47 = sbr.rel (0) target = $region17
    $region16: #{mae_forward.1} parent=1 // pred_region
      %49 = dma.done [#allocation3], 640
    $region17: #{mae_forward.1} parent=1 // pred_fallthru
      _
    // Predicated region
    $region18: #{mae_forward.1} parent=1 // pred_check
      _
    $region19: #{mae_forward.1} parent=1 // pred_check_branch
      %51 = sbr.rel (0) target = $region21
    $region20: #{mae_forward.1} parent=1 // pred_region
      %53 = dma.done [#allocation6], 45440
    $region21: #{mae_forward.1} parent=1 // pred_fallthru
      _
    // Predicated region
    $region22: #{mae_forward.1} parent=1 // pred_check
      _
    $region23: #{mae_forward.1} parent=1 // pred_check_branch
      %55 = sbr.rel (0) target = $region25
    $region24: #{mae_forward.1} parent=1 // pred_region
      %57 = dma.done [#allocation6], 80
    $region25: #{mae_forward.1} parent=1 // pred_fallthru
      _
    %v58 = vld [vmem:[#allocation2] sm:$0xff]
    %v59 = vld [vmem:[#allocation2 + $0x8] sm:$0xff]
    %v60 = vld [vmem:[#allocation2 + $0x10] sm:$0xff]
    %v61 = vld [vmem:[#allocation2 + $0x18] sm:$0xff]
    %v62 = vld [vmem:[#allocation2 + $0x20] sm:$0xff]
    %v63 = vld [vmem:[#allocation5] sm:$0xff]
    %v64 = vld [vmem:[#allocation5 + $0x8] sm:$0xff]
    %v65 = vld [vmem:[#allocation5 + $0x10] sm:$0xff]
    %v66 = vld [vmem:[#allocation5 + $0x18] sm:$0xff]
    %v67 = vld [vmem:[#allocation5 + $0x20] sm:$0xff]
    %v68 = vld [vmem:[#allocation5 + $0x28] sm:$0xff]
    %v69 = vld [vmem:[#allocation5 + $0x30] sm:$0xff]
    %v70 = vld [vmem:[#allocation5 + $0x38] sm:$0xff]
    %v71 = vld [vmem:[#allocation5 + $0x40] sm:$0xff]
    %v72 = vld [vmem:[#allocation5 + $0x48] sm:$0xff]
    %v73 = vld [vmem:[#allocation5 + $0x50] sm:$0xff]
    %v74 = vld [vmem:[#allocation5 + $0x58] sm:$0xff]
    %v75 = vld [vmem:[#allocation5 + $0x60] sm:$0xff]
    %v76 = vld [vmem:[#allocation5 + $0x68] sm:$0xff]
    %v77 = vld [vmem:[#allocation5 + $0x70] sm:$0xff]
    %v78 = vld [vmem:[#allocation5 + $0x78] sm:$0xff]
    %v79 = vld [vmem:[#allocation5 + $0x80] sm:$0xff]
    %v80 = vld [vmem:[#allocation5 + $0x88] sm:$0xff]
    %v81 = vld [vmem:[#allocation5 + $0x90] sm:$0xff]
    %v82 = vld [vmem:[#allocation5 + $0x98] sm:$0xff]
    %v83 = vld [vmem:[#allocation5 + $0xa0] sm:$0xff]
    %v84 = vld [vmem:[#allocation5 + $0xa8] sm:$0xff]
    %v85 = vld [vmem:[#allocation5 + $0xb0] sm:$0xff]
    %v86 = vld [vmem:[#allocation5 + $0xb8] sm:$0xff]
    %v87 = vld [vmem:[#allocation5 + $0xc0] sm:$0xff]
    %v88 = vld [vmem:[#allocation5 + $0xc8] sm:$0xff]
    %v89 = vld [vmem:[#allocation5 + $0xd0] sm:$0xff]
    %v90 = vld [vmem:[#allocation5 + $0xd8] sm:$0xff]
    %v91 = vld [vmem:[#allocation5 + $0xe0] sm:$0xff]
    %v92 = vld [vmem:[#allocation5 + $0xe8] sm:$0xff]
    %v93 = vld [vmem:[#allocation5 + $0xf0] sm:$0xff]
    %v94 = vld [vmem:[#allocation5 + $0xf8] sm:$0xff]
    %v95 = vld [vmem:[#allocation5 + $0x100] sm:$0xff]
    %v96 = vld [vmem:[#allocation5 + $0x108] sm:$0xff]
    %v97 = vld [vmem:[#allocation5 + $0x110] sm:$0xff]
    %v98 = vld [vmem:[#allocation5 + $0x118] sm:$0xff]
    %v99 = vld [vmem:[#allocation5 + $0x120] sm:$0xff]
    %v100 = vld [vmem:[#allocation5 + $0x128] sm:$0xff]
    %v101 = vld [vmem:[#allocation5 + $0x130] sm:$0xff]
    %v102 = vld [vmem:[#allocation5 + $0x138] sm:$0xff]
    %v103 = vld [vmem:[#allocation5 + $0x140] sm:$0xff]
    %v104 = vld [vmem:[#allocation5 + $0x148] sm:$0xff]
    %v105 = vld [vmem:[#allocation5 + $0x150] sm:$0xff]
    %v106 = vld [vmem:[#allocation5 + $0x158] sm:$0xff]
    %v107 = vld [vmem:[#allocation5 + $0x160] sm:$0xff]
    %v108 = vld [vmem:[#allocation5 + $0x168] sm:$0xff]
    %v109 = vld [vmem:[#allocation5 + $0x170] sm:$0xff]
    %v110 = vld [vmem:[#allocation5 + $0x178] sm:$0xff]
    %v111 = vld [vmem:[#allocation5 + $0x180] sm:$0xff]
    %v112 = vld [vmem:[#allocation5 + $0x188] sm:$0xff]
    %v113 = vld [vmem:[#allocation5 + $0x190] sm:$0xff]
    %v114 = vld [vmem:[#allocation5 + $0x198] sm:$0xff]
    %v115 = vld [vmem:[#allocation5 + $0x1a0] sm:$0xff]
    %v116 = vld [vmem:[#allocation5 + $0x1a8] sm:$0xff]
    %v117 = vld [vmem:[#allocation5 + $0x1b0] sm:$0xff]
    %v118 = vld [vmem:[#allocation5 + $0x1b8] sm:$0xff]
    %v119 = vld [vmem:[#allocation5 + $0x1c0] sm:$0xff]
    %v120 = vld [vmem:[#allocation5 + $0x1c8] sm:$0xff]
    %v121 = vld [vmem:[#allocation5 + $0x1d0] sm:$0xff]
    %v122 = vld [vmem:[#allocation5 + $0x1d8] sm:$0xff]
    %v123 = vld [vmem:[#allocation5 + $0x1e0] sm:$0xff]
    %v124 = vld [vmem:[#allocation5 + $0x1e8] sm:$0xff]
    %v125 = vld [vmem:[#allocation5 + $0x1f0] sm:$0xff]
    %v126 = vld [vmem:[#allocation5 + $0x1f8] sm:$0xff]
    %v127 = vld [vmem:[#allocation5 + $0x200] sm:$0xff]
    %v128 = vld [vmem:[#allocation5 + $0x208] sm:$0xff]
    %v129 = vld [vmem:[#allocation5 + $0x210] sm:$0xff]
    %v130 = vld [vmem:[#allocation5 + $0x218] sm:$0xff]
    %v131 = vld [vmem:[#allocation5 + $0x220] sm:$0xff]
    %v132 = vld [vmem:[#allocation5 + $0x228] sm:$0xff]
    %v133 = vld [vmem:[#allocation5 + $0x230] sm:$0xff]
    %v134 = vld [vmem:[#allocation5 + $0x238] sm:$0xff]
    %v135 = vld [vmem:[#allocation5 + $0x240] sm:$0xff]
    %v136 = vld [vmem:[#allocation5 + $0x248] sm:$0xff]
    %v137 = vld [vmem:[#allocation5 + $0x250] sm:$0xff]
    %v138 = vld [vmem:[#allocation5 + $0x258] sm:$0xff]
    %v139 = vld [vmem:[#allocation5 + $0x260] sm:$0xff]
    %v140 = vld [vmem:[#allocation5 + $0x268] sm:$0xff]
    %v141 = vld [vmem:[#allocation5 + $0x270] sm:$0xff]
    %v142 = vld [vmem:[#allocation5 + $0x278] sm:$0xff]
    %v143 = vld [vmem:[#allocation5 + $0x280] sm:$0xff]
    %v144 = vld [vmem:[#allocation5 + $0x288] sm:$0xff]
    %v145 = vld [vmem:[#allocation5 + $0x290] sm:$0xff]
    %v146 = vld [vmem:[#allocation5 + $0x298] sm:$0xff]
    %v147 = vld [vmem:[#allocation5 + $0x2a0] sm:$0xff]
    %v148 = vld [vmem:[#allocation5 + $0x2a8] sm:$0xff]
    %v149 = vld [vmem:[#allocation5 + $0x2b0] sm:$0xff]
    %v150 = vld [vmem:[#allocation5 + $0x2b8] sm:$0xff]
    %v151 = vld [vmem:[#allocation5 + $0x2c0] sm:$0xff]
    %v152 = vld [vmem:[#allocation5 + $0x2c8] sm:$0xff]
    %v153 = vld [vmem:[#allocation5 + $0x2d0] sm:$0xff]
    %v154 = vld [vmem:[#allocation5 + $0x2d8] sm:$0xff]
    %v155 = vld [vmem:[#allocation5 + $0x2e0] sm:$0xff]
    %v156 = vld [vmem:[#allocation5 + $0x2e8] sm:$0xff]
    %v157 = vld [vmem:[#allocation5 + $0x2f0] sm:$0xff]
    %v158 = vld [vmem:[#allocation5 + $0x2f8] sm:$0xff]
    %v159 = vld [vmem:[#allocation5 + $0x300] sm:$0xff]
    %v160 = vld [vmem:[#allocation5 + $0x308] sm:$0xff]
    %v161 = vld [vmem:[#allocation5 + $0x310] sm:$0xff]
    %v162 = vld [vmem:[#allocation5 + $0x318] sm:$0xff]
    %v163 = vld [vmem:[#allocation5 + $0x320] sm:$0xff]
    %v164 = vld [vmem:[#allocation5 + $0x328] sm:$0xff]
    %v165 = vld [vmem:[#allocation5 + $0x330] sm:$0xff]
    %v166 = vld [vmem:[#allocation5 + $0x338] sm:$0xff]
    %v167 = vld [vmem:[#allocation5 + $0x340] sm:$0xff]
    %v168 = vld [vmem:[#allocation5 + $0x348] sm:$0xff]
    %v169 = vld [vmem:[#allocation5 + $0x350] sm:$0xff]
    %v170 = vld [vmem:[#allocation5 + $0x358] sm:$0xff]
    %v171 = vld [vmem:[#allocation5 + $0x360] sm:$0xff]
    %v172 = vld [vmem:[#allocation5 + $0x368] sm:$0xff]
    %v173 = vld [vmem:[#allocation5 + $0x370] sm:$0xff]
    %v174 = vld [vmem:[#allocation5 + $0x378] sm:$0xff]
    %v175 = vld [vmem:[#allocation5 + $0x380] sm:$0xff]
    %v176 = vld [vmem:[#allocation5 + $0x388] sm:$0xff]
    %v177 = vld [vmem:[#allocation5 + $0x390] sm:$0xff]
    %v178 = vld [vmem:[#allocation5 + $0x398] sm:$0xff]
    %v179 = vld [vmem:[#allocation5 + $0x3a0] sm:$0xff]
    %v180 = vld [vmem:[#allocation5 + $0x3a8] sm:$0xff]
    %v181 = vld [vmem:[#allocation5 + $0x3b0] sm:$0xff]
    %v182 = vld [vmem:[#allocation5 + $0x3b8] sm:$0xff]
    %v183 = vld [vmem:[#allocation5 + $0x3c0] sm:$0xff]
    %v184 = vld [vmem:[#allocation5 + $0x3c8] sm:$0xff]
    %v185 = vld [vmem:[#allocation5 + $0x3d0] sm:$0xff]
    %v186 = vld [vmem:[#allocation5 + $0x3d8] sm:$0xff]
    %v187 = vld [vmem:[#allocation5 + $0x3e0] sm:$0xff]
    %v188 = vld [vmem:[#allocation5 + $0x3e8] sm:$0xff]
    %v189 = vld [vmem:[#allocation5 + $0x3f0] sm:$0xff]
    %v190 = vld [vmem:[#allocation5 + $0x3f8] sm:$0xff]
    %v191 = vld [vmem:[#allocation5 + $0x400] sm:$0xff]
    %v192 = vld [vmem:[#allocation5 + $0x408] sm:$0xff]
    %v193 = vld [vmem:[#allocation5 + $0x410] sm:$0xff]
    %v194 = vld [vmem:[#allocation5 + $0x418] sm:$0xff]
    %v195 = vld [vmem:[#allocation5 + $0x420] sm:$0xff]
    %v196 = vld [vmem:[#allocation5 + $0x428] sm:$0xff]
    %v197 = vld [vmem:[#allocation5 + $0x430] sm:$0xff]
    %v198 = vld [vmem:[#allocation5 + $0x438] sm:$0xff]
    %v199 = vld [vmem:[#allocation5 + $0x440] sm:$0xff]
    %v200 = vld [vmem:[#allocation5 + $0x448] sm:$0xff]
    %v201 = vld [vmem:[#allocation5 + $0x450] sm:$0xff]
    %v202 = vld [vmem:[#allocation5 + $0x458] sm:$0xff]
    %v203 = vld [vmem:[#allocation5 + $0x460] sm:$0xff]
    %v204 = vld [vmem:[#allocation5 + $0x468] sm:$0xff]
    %v205 = vld [vmem:[#allocation5 + $0x470] sm:$0xff]
    %v206 = vld [vmem:[#allocation5 + $0x478] sm:$0xff]
    %v207 = vld [vmem:[#allocation5 + $0x480] sm:$0xff]
    %v208 = vld [vmem:[#allocation5 + $0x488] sm:$0xff]
    %v209 = vld [vmem:[#allocation5 + $0x490] sm:$0xff]
    %v210 = vld [vmem:[#allocation5 + $0x498] sm:$0xff]
    %v211 = vld [vmem:[#allocation5 + $0x4a0] sm:$0xff]
    %v212 = vld [vmem:[#allocation5 + $0x4a8] sm:$0xff]
    %v213 = vld [vmem:[#allocation5 + $0x4b0] sm:$0xff]
    %v214 = vld [vmem:[#allocation5 + $0x4b8] sm:$0xff]
    %v215 = vld [vmem:[#allocation5 + $0x4c0] sm:$0xff]
    %v216 = vld [vmem:[#allocation5 + $0x4c8] sm:$0xff]
    %v217 = vld [vmem:[#allocation5 + $0x4d0] sm:$0xff]
    %v218 = vld [vmem:[#allocation5 + $0x4d8] sm:$0xff]
    %v219 = vld [vmem:[#allocation5 + $0x4e0] sm:$0xff]
    %v220 = vld [vmem:[#allocation5 + $0x4e8] sm:$0xff]
    %v221 = vld [vmem:[#allocation5 + $0x4f0] sm:$0xff]
    %v222 = vld [vmem:[#allocation5 + $0x4f8] sm:$0xff]
    %v223 = vld [vmem:[#allocation5 + $0x500] sm:$0xff]
    %v224 = vld [vmem:[#allocation5 + $0x508] sm:$0xff]
    %v225 = vld [vmem:[#allocation5 + $0x510] sm:$0xff]
    %v226 = vld [vmem:[#allocation5 + $0x518] sm:$0xff]
    %v227 = vld [vmem:[#allocation5 + $0x520] sm:$0xff]
    %v228 = vld [vmem:[#allocation5 + $0x528] sm:$0xff]
    %v229 = vld [vmem:[#allocation5 + $0x530] sm:$0xff]
    %v230 = vld [vmem:[#allocation5 + $0x538] sm:$0xff]
    %v231 = vld [vmem:[#allocation5 + $0x540] sm:$0xff]
    %v232 = vld [vmem:[#allocation5 + $0x548] sm:$0xff]
    %v233 = vld [vmem:[#allocation5 + $0x550] sm:$0xff]
    %v234 = vld [vmem:[#allocation5 + $0x558] sm:$0xff]
    %v235 = vld [vmem:[#allocation5 + $0x560] sm:$0xff]
    %v236 = vld [vmem:[#allocation5 + $0x568] sm:$0xff]
    %v237 = vld [vmem:[#allocation5 + $0x570] sm:$0xff]
    %v238 = vld [vmem:[#allocation5 + $0x578] sm:$0xff]
    %v239 = vld [vmem:[#allocation5 + $0x580] sm:$0xff]
    %v240 = vld [vmem:[#allocation5 + $0x588] sm:$0xff]
    %v241 = vld [vmem:[#allocation5 + $0x590] sm:$0xff]
    %v242 = vld [vmem:[#allocation5 + $0x598] sm:$0xff]
    %v243 = vld [vmem:[#allocation5 + $0x5a0] sm:$0xff]
    %v244 = vld [vmem:[#allocation5 + $0x5a8] sm:$0xff]
    %v245 = vld [vmem:[#allocation5 + $0x5b0] sm:$0xff]
    %v246 = vld [vmem:[#allocation5 + $0x5b8] sm:$0xff]
    %v247 = vld [vmem:[#allocation5 + $0x5c0] sm:$0xff]
    %v248 = vld [vmem:[#allocation5 + $0x5c8] sm:$0xff]
    %v249 = vld [vmem:[#allocation5 + $0x5d0] sm:$0xff]
    %v250 = vld [vmem:[#allocation5 + $0x5d8] sm:$0xff]
    %v251 = vld [vmem:[#allocation5 + $0x5e0] sm:$0xff]
    %v252 = vld [vmem:[#allocation5 + $0x5e8] sm:$0xff]
    %v253 = vld [vmem:[#allocation5 + $0x5f0] sm:$0xff]
    %v254 = vld [vmem:[#allocation5 + $0x5f8] sm:$0xff]
    %v255 = vld [vmem:[#allocation5 + $0x600] sm:$0xff]
    %v256 = vld [vmem:[#allocation5 + $0x608] sm:$0xff]
    %v257 = vld [vmem:[#allocation5 + $0x610] sm:$0xff]
    %v258 = vld [vmem:[#allocation5 + $0x618] sm:$0xff]
    %v259 = vld [vmem:[#allocation5 + $0x620] sm:$0xff]
    %v260 = vld [vmem:[#allocation5 + $0x628] sm:$0xff]
    %v261 = vld [vmem:[#allocation5 + $0x630] sm:$0xff]
    %v262 = vld [vmem:[#allocation5 + $0x638] sm:$0xff]
    %v263 = vld [vmem:[#allocation5 + $0x640] sm:$0xff]
    %v264 = vld [vmem:[#allocation5 + $0x648] sm:$0xff]
    %v265 = vld [vmem:[#allocation5 + $0x650] sm:$0xff]
    %v266 = vld [vmem:[#allocation5 + $0x658] sm:$0xff]
    %v267 = vld [vmem:[#allocation5 + $0x660] sm:$0xff]
    %v268 = vld [vmem:[#allocation5 + $0x668] sm:$0xff]
    %v269 = vld [vmem:[#allocation5 + $0x670] sm:$0xff]
    %v270 = vld [vmem:[#allocation5 + $0x678] sm:$0xff]
    %v271 = vld [vmem:[#allocation5 + $0x680] sm:$0xff]
    %v272 = vld [vmem:[#allocation5 + $0x688] sm:$0xff]
    %v273 = vld [vmem:[#allocation5 + $0x690] sm:$0xff]
    %v274 = vld [vmem:[#allocation5 + $0x698] sm:$0xff]
    %v275 = vld [vmem:[#allocation5 + $0x6a0] sm:$0xff]
    %v276 = vld [vmem:[#allocation5 + $0x6a8] sm:$0xff]
    %v277 = vld [vmem:[#allocation5 + $0x6b0] sm:$0xff]
    %v278 = vld [vmem:[#allocation5 + $0x6b8] sm:$0xff]
    %v279 = vld [vmem:[#allocation5 + $0x6c0] sm:$0xff]
    %v280 = vld [vmem:[#allocation5 + $0x6c8] sm:$0xff]
    %v281 = vld [vmem:[#allocation5 + $0x6d0] sm:$0xff]
    %v282 = vld [vmem:[#allocation5 + $0x6d8] sm:$0xff]
    %v283 = vld [vmem:[#allocation5 + $0x6e0] sm:$0xff]
    %v284 = vld [vmem:[#allocation5 + $0x6e8] sm:$0xff]
    %v285 = vld [vmem:[#allocation5 + $0x6f0] sm:$0xff]
    %v286 = vld [vmem:[#allocation5 + $0x6f8] sm:$0xff]
    %v287 = vld [vmem:[#allocation5 + $0x700] sm:$0xff]
    %v288 = vld [vmem:[#allocation5 + $0x708] sm:$0xff]
    %v289 = vld [vmem:[#allocation5 + $0x710] sm:$0xff]
    %v290 = vld [vmem:[#allocation5 + $0x718] sm:$0xff]
    %v291 = vld [vmem:[#allocation5 + $0x720] sm:$0xff]
    %v292 = vld [vmem:[#allocation5 + $0x728] sm:$0xff]
    %v293 = vld [vmem:[#allocation5 + $0x730] sm:$0xff]
    %v294 = vld [vmem:[#allocation5 + $0x738] sm:$0xff]
    %v295 = vld [vmem:[#allocation5 + $0x740] sm:$0xff]
    %v296 = vld [vmem:[#allocation5 + $0x748] sm:$0xff]
    %v297 = vld [vmem:[#allocation5 + $0x750] sm:$0xff]
    %v298 = vld [vmem:[#allocation5 + $0x758] sm:$0xff]
    %v299 = vld [vmem:[#allocation5 + $0x760] sm:$0xff]
    %v300 = vld [vmem:[#allocation5 + $0x768] sm:$0xff]
    %v301 = vld [vmem:[#allocation5 + $0x770] sm:$0xff]
    %v302 = vld [vmem:[#allocation5 + $0x778] sm:$0xff]
    %v303 = vld [vmem:[#allocation5 + $0x780] sm:$0xff]
    %v304 = vld [vmem:[#allocation5 + $0x788] sm:$0xff]
    %v305 = vld [vmem:[#allocation5 + $0x790] sm:$0xff]
    %v306 = vld [vmem:[#allocation5 + $0x798] sm:$0xff]
    %v307 = vld [vmem:[#allocation5 + $0x7a0] sm:$0xff]
    %v308 = vld [vmem:[#allocation5 + $0x7a8] sm:$0xff]
    %v309 = vld [vmem:[#allocation5 + $0x7b0] sm:$0xff]
    %v310 = vld [vmem:[#allocation5 + $0x7b8] sm:$0xff]
    %v311 = vld [vmem:[#allocation5 + $0x7c0] sm:$0xff]
    %v312 = vld [vmem:[#allocation5 + $0x7c8] sm:$0xff]
    %v313 = vld [vmem:[#allocation5 + $0x7d0] sm:$0xff]
    %v314 = vld [vmem:[#allocation5 + $0x7d8] sm:$0xff]
    %v315 = vld [vmem:[#allocation5 + $0x7e0] sm:$0xff]
    %v316 = vld [vmem:[#allocation5 + $0x7e8] sm:$0xff]
    %v317 = vld [vmem:[#allocation5 + $0x7f0] sm:$0xff]
    %v318 = vld [vmem:[#allocation5 + $0x7f8] sm:$0xff]
    %v319 = vld [vmem:[#allocation5 + $0x800] sm:$0xff]
    %v320 = vld [vmem:[#allocation5 + $0x808] sm:$0xff]
    %v321 = vld [vmem:[#allocation5 + $0x810] sm:$0xff]
    %v322 = vld [vmem:[#allocation5 + $0x818] sm:$0xff]
    %v323 = vld [vmem:[#allocation5 + $0x820] sm:$0xff]
    %v324 = vld [vmem:[#allocation5 + $0x828] sm:$0xff]
    %v325 = vld [vmem:[#allocation5 + $0x830] sm:$0xff]
    %v326 = vld [vmem:[#allocation5 + $0x838] sm:$0xff]
    %v327 = vld [vmem:[#allocation5 + $0x840] sm:$0xff]
    %v328 = vld [vmem:[#allocation5 + $0x848] sm:$0xff]
    %v329 = vld [vmem:[#allocation5 + $0x850] sm:$0xff]
    %v330 = vld [vmem:[#allocation5 + $0x858] sm:$0xff]
    %v331 = vld [vmem:[#allocation5 + $0x860] sm:$0xff]
    %v332 = vld [vmem:[#allocation5 + $0x868] sm:$0xff]
    %v333 = vld [vmem:[#allocation5 + $0x870] sm:$0xff]
    %v334 = vld [vmem:[#allocation5 + $0x878] sm:$0xff]
    %v335 = vld [vmem:[#allocation5 + $0x880] sm:$0xff]
    %v336 = vld [vmem:[#allocation5 + $0x888] sm:$0xff]
    %v337 = vld [vmem:[#allocation5 + $0x890] sm:$0xff]
    %v338 = vld [vmem:[#allocation5 + $0x898] sm:$0xff]
    %v339 = vld [vmem:[#allocation5 + $0x8a0] sm:$0xff]
    %v340 = vld [vmem:[#allocation5 + $0x8a8] sm:$0xff]
    %v341 = vld [vmem:[#allocation5 + $0x8b0] sm:$0xff]
    %v342 = vld [vmem:[#allocation5 + $0x8b8] sm:$0xff]
    %v343 = vld [vmem:[#allocation5 + $0x8c0] sm:$0xff]
    %v344 = vld [vmem:[#allocation5 + $0x8c8] sm:$0xff]
    %v345 = vld [vmem:[#allocation5 + $0x8d0] sm:$0xff]
    %v346 = vld [vmem:[#allocation5 + $0x8d8] sm:$0xff]
    %v347 = vld [vmem:[#allocation5 + $0x8e0] sm:$0xff]
    %v348 = vld [vmem:[#allocation5 + $0x8e8] sm:$0xff]
    %v349 = vld [vmem:[#allocation5 + $0x8f0] sm:$0xff]
    %v350 = vld [vmem:[#allocation5 + $0x8f8] sm:$0xff]
    %v351 = vld [vmem:[#allocation5 + $0x900] sm:$0xff]
    %v352 = vld [vmem:[#allocation5 + $0x908] sm:$0xff]
    %v353 = vld [vmem:[#allocation5 + $0x910] sm:$0xff]
    %v354 = vld [vmem:[#allocation5 + $0x918] sm:$0xff]
    %v355 = vld [vmem:[#allocation5 + $0x920] sm:$0xff]
    %v356 = vld [vmem:[#allocation5 + $0x928] sm:$0xff]
    %v357 = vld [vmem:[#allocation5 + $0x930] sm:$0xff]
    %v358 = vld [vmem:[#allocation5 + $0x938] sm:$0xff]
    %v359 = vld [vmem:[#allocation5 + $0x940] sm:$0xff]
    %v360 = vld [vmem:[#allocation5 + $0x948] sm:$0xff]
    %v361 = vld [vmem:[#allocation5 + $0x950] sm:$0xff]
    %v362 = vld [vmem:[#allocation5 + $0x958] sm:$0xff]
    %v363 = vld [vmem:[#allocation5 + $0x960] sm:$0xff]
    %v364 = vld [vmem:[#allocation5 + $0x968] sm:$0xff]
    %v365 = vld [vmem:[#allocation5 + $0x970] sm:$0xff]
    %v366 = vld [vmem:[#allocation5 + $0x978] sm:$0xff]
    %v367 = vld [vmem:[#allocation5 + $0x980] sm:$0xff]
    %v368 = vld [vmem:[#allocation5 + $0x988] sm:$0xff]
    %v369 = vld [vmem:[#allocation5 + $0x990] sm:$0xff]
    %v370 = vld [vmem:[#allocation5 + $0x998] sm:$0xff]
    %v371 = vld [vmem:[#allocation5 + $0x9a0] sm:$0xff]
    %v372 = vld [vmem:[#allocation5 + $0x9a8] sm:$0xff]
    %v373 = vld [vmem:[#allocation5 + $0x9b0] sm:$0xff]
    %v374 = vld [vmem:[#allocation5 + $0x9b8] sm:$0xff]
    %v375 = vld [vmem:[#allocation5 + $0x9c0] sm:$0xff]
    %v376 = vld [vmem:[#allocation5 + $0x9c8] sm:$0xff]
    %v377 = vld [vmem:[#allocation5 + $0x9d0] sm:$0xff]
    %v378 = vld [vmem:[#allocation5 + $0x9d8] sm:$0xff]
    %v379 = vld [vmem:[#allocation5 + $0x9e0] sm:$0xff]
    %v380 = vld [vmem:[#allocation5 + $0x9e8] sm:$0xff]
    %v381 = vld [vmem:[#allocation5 + $0x9f0] sm:$0xff]
    %v382 = vld [vmem:[#allocation5 + $0x9f8] sm:$0xff]
    %v383 = vld [vmem:[#allocation5 + $0xa00] sm:$0xff]
    %v384 = vld [vmem:[#allocation5 + $0xa08] sm:$0xff]
    %v385 = vld [vmem:[#allocation5 + $0xa10] sm:$0xff]
    %v386 = vld [vmem:[#allocation5 + $0xa18] sm:$0xff]
    %v387 = vld [vmem:[#allocation5 + $0xa20] sm:$0xff]
    %v388 = vld [vmem:[#allocation5 + $0xa28] sm:$0xff]
    %v389 = vld [vmem:[#allocation5 + $0xa30] sm:$0xff]
    %v390 = vld [vmem:[#allocation5 + $0xa38] sm:$0xff]
    %v391 = vld [vmem:[#allocation5 + $0xa40] sm:$0xff]
    %v392 = vld [vmem:[#allocation5 + $0xa48] sm:$0xff]
    %v393 = vld [vmem:[#allocation5 + $0xa50] sm:$0xff]
    %v394 = vld [vmem:[#allocation5 + $0xa58] sm:$0xff]
    %v395 = vld [vmem:[#allocation5 + $0xa60] sm:$0xff]
    %v396 = vld [vmem:[#allocation5 + $0xa68] sm:$0xff]
    %v397 = vld [vmem:[#allocation5 + $0xa70] sm:$0xff]
    %v398 = vld [vmem:[#allocation5 + $0xa78] sm:$0xff]
    %v399 = vld [vmem:[#allocation5 + $0xa80] sm:$0xff]
    %v400 = vld [vmem:[#allocation5 + $0xa88] sm:$0xff]
    %v401 = vld [vmem:[#allocation5 + $0xa90] sm:$0xff]
    %v402 = vld [vmem:[#allocation5 + $0xa98] sm:$0xff]
    %v403 = vld [vmem:[#allocation5 + $0xaa0] sm:$0xff]
    %v404 = vld [vmem:[#allocation5 + $0xaa8] sm:$0xff]
    %v405 = vld [vmem:[#allocation5 + $0xab0] sm:$0xff]
    %v406 = vld [vmem:[#allocation5 + $0xab8] sm:$0xff]
    %v407 = vld [vmem:[#allocation5 + $0xac0] sm:$0xff]
    %v408 = vld [vmem:[#allocation5 + $0xac8] sm:$0xff]
    %v409 = vld [vmem:[#allocation5 + $0xad0] sm:$0xff]
    %v410 = vld [vmem:[#allocation5 + $0xad8] sm:$0xff]
    %v411 = vld [vmem:[#allocation5 + $0xae0] sm:$0xff]
    %v412 = vld [vmem:[#allocation5 + $0xae8] sm:$0xff]
    %v413 = vld [vmem:[#allocation5 + $0xaf0] sm:$0x1]
    %v414 = vld [vmem:[#allocation5 + $0xaf8] sm:$0x1]
    %v415 = vld [vmem:[#allocation5 + $0xb00] sm:$0x1]
    %v416 = vld [vmem:[#allocation5 + $0xb08] sm:$0x1]
    %v417 = vld [vmem:[#allocation5 + $0xb10] sm:$0x1]
    %v418 = vld [vmem:[#allocation7] sm:$0x1f]
    %v420 = vperm.slane %v418, 0
    %v421 = vperm.slane %v418, 1
    %v422 = vperm.slane %v418, 2
    %v423 = vperm.slane %v418, 3
    %v424 = vperm.slane %v418, 4
    %vm430 = vcmask 400384
    %v432 = vsel %vm430, %v62, 0
    %vm434 = vcmask 1040384
    %v436 = vsel %vm434, %v413, 0
    %v439 = vsel %vm434, %v414, 0
    %v442 = vsel %vm434, %v415, 0
    %v445 = vsel %vm434, %v416, 0
    %v448 = vsel %vm434, %v417, 0
    %450 = vmatpush.msra.mxu0 %v138
    %451 = vmatpush.msra.mxu0 %v133
    %452 = vmatpush.msra.mxu0 %v128
    %453 = vmatpush.msra.mxu0 %v123
    %454 = vmatpush.msra.mxu0 %v118
    %455 = vmatpush.msra.mxu0 %v113
    %456 = vmatpush.msra.mxu0 %v108
    %457 = vmatpush.msra.mxu0 %v103
    %458 = vmatpush.msra.mxu0 %v98
    %459 = vmatpush.msra.mxu0 %v93
    %460 = vmatpush.msra.mxu0 %v88
    %461 = vmatpush.msra.mxu0 %v83
    %462 = vmatpush.msra.mxu0 %v78
    %463 = vmatpush.msra.mxu0 %v73
    %464 = vmatpush.msra.mxu0 %v68
    %465 = vmatpush.msra.mxu0 %v63
    %466 = vmatmul.f32.gmra.mxu0 %v58
    %v467 = vpop.f32.mrf.mxu0
    %v468 = vadd.f32 %v420, %v467
    %469 = vdwg.mxu0
    %470 = vmatpush.msra.mxu0 %v218
    %471 = vmatpush.msra.mxu0 %v213
    %472 = vmatpush.msra.mxu0 %v208
    %473 = vmatpush.msra.mxu0 %v203
    %474 = vmatpush.msra.mxu0 %v198
    %475 = vmatpush.msra.mxu0 %v193
    %476 = vmatpush.msra.mxu0 %v188
    %477 = vmatpush.msra.mxu0 %v183
    %478 = vmatpush.msra.mxu0 %v178
    %479 = vmatpush.msra.mxu0 %v173
    %480 = vmatpush.msra.mxu0 %v168
    %481 = vmatpush.msra.mxu0 %v163
    %482 = vmatpush.msra.mxu0 %v158
    %483 = vmatpush.msra.mxu0 %v153
    %484 = vmatpush.msra.mxu0 %v148
    %485 = vmatpush.msra.mxu0 %v143
    %486 = vmatmul.f32.gmra.mxu0 %v59
    %v487 = vpop.f32.mrf.mxu0
    %v488 = vadd.f32 %v468, %v487
    %489 = vdwg.mxu0
    %490 = vmatpush.msra.mxu0 %v298
    %491 = vmatpush.msra.mxu0 %v293
    %492 = vmatpush.msra.mxu0 %v288
    %493 = vmatpush.msra.mxu0 %v283
    %494 = vmatpush.msra.mxu0 %v278
    %495 = vmatpush.msra.mxu0 %v273
    %496 = vmatpush.msra.mxu0 %v268
    %497 = vmatpush.msra.mxu0 %v263
    %498 = vmatpush.msra.mxu0 %v258
    %499 = vmatpush.msra.mxu0 %v253
    %500 = vmatpush.msra.mxu0 %v248
    %501 = vmatpush.msra.mxu0 %v243
    %502 = vmatpush.msra.mxu0 %v238
    %503 = vmatpush.msra.mxu0 %v233
    %504 = vmatpush.msra.mxu0 %v228
    %505 = vmatpush.msra.mxu0 %v223
    %506 = vmatmul.f32.gmra.mxu0 %v60
    %v507 = vpop.f32.mrf.mxu0
    %v508 = vadd.f32 %v488, %v507
    %509 = vdwg.mxu0
    %510 = vmatpush.msra.mxu0 %v378
    %511 = vmatpush.msra.mxu0 %v373
    %512 = vmatpush.msra.mxu0 %v368
    %513 = vmatpush.msra.mxu0 %v363
    %514 = vmatpush.msra.mxu0 %v358
    %515 = vmatpush.msra.mxu0 %v353
    %516 = vmatpush.msra.mxu0 %v348
    %517 = vmatpush.msra.mxu0 %v343
    %518 = vmatpush.msra.mxu0 %v338
    %519 = vmatpush.msra.mxu0 %v333
    %520 = vmatpush.msra.mxu0 %v328
    %521 = vmatpush.msra.mxu0 %v323
    %522 = vmatpush.msra.mxu0 %v318
    %523 = vmatpush.msra.mxu0 %v313
    %524 = vmatpush.msra.mxu0 %v308
    %525 = vmatpush.msra.mxu0 %v303
    %526 = vmatmul.f32.gmra.mxu0 %v61
    %v527 = vpop.f32.mrf.mxu0
    %v528 = vadd.f32 %v508, %v527
    %529 = vdwg.mxu0
    %530 = vmatpush.msra.mxu0 0.0
    %531 = vmatpush.msra.mxu0 0.0
    %532 = vmatpush.msra.mxu0 0.0
    %533 = vmatpush.msra.mxu0 0.0
    %534 = vmatpush.msra.mxu0 0.0
    %535 = vmatpush.msra.mxu0 0.0
    %536 = vmatpush.msra.mxu0 0.0
    %537 = vmatpush.msra.mxu0 0.0
    %538 = vmatpush.msra.mxu0 0.0
    %539 = vmatpush.msra.mxu0 %v436
    %540 = vmatpush.msra.mxu0 %v408
    %541 = vmatpush.msra.mxu0 %v403
    %542 = vmatpush.msra.mxu0 %v398
    %543 = vmatpush.msra.mxu0 %v393
    %544 = vmatpush.msra.mxu0 %v388
    %545 = vmatpush.msra.mxu0 %v383
    %546 = vmatmul.f32.gmra.mxu0 %v432
    %v547 = vpop.f32.mrf.mxu0
    %v548 = vadd.f32 %v528, %v547
    %549 = vdwg.mxu0
    %550 = vmatpush.msra.mxu0 %v139
    %551 = vmatpush.msra.mxu0 %v134
    %552 = vmatpush.msra.mxu0 %v129
    %553 = vmatpush.msra.mxu0 %v124
    %554 = vmatpush.msra.mxu0 %v119
    %555 = vmatpush.msra.mxu0 %v114
    %556 = vmatpush.msra.mxu0 %v109
    %557 = vmatpush.msra.mxu0 %v104
    %558 = vmatpush.msra.mxu0 %v99
    %559 = vmatpush.msra.mxu0 %v94
    %560 = vmatpush.msra.mxu0 %v89
    %561 = vmatpush.msra.mxu0 %v84
    %562 = vmatpush.msra.mxu0 %v79
    %563 = vmatpush.msra.mxu0 %v74
    %564 = vmatpush.msra.mxu0 %v69
    %565 = vmatpush.msra.mxu0 %v64
    %566 = vmatmul.f32.gmra.mxu0 %v58
    %v567 = vpop.f32.mrf.mxu0
    %v568 = vadd.f32 %v421, %v567
    %569 = vdwg.mxu0
    %570 = vmatpush.msra.mxu0 %v219
    %571 = vmatpush.msra.mxu0 %v214
    %572 = vmatpush.msra.mxu0 %v209
    %573 = vmatpush.msra.mxu0 %v204
    %574 = vmatpush.msra.mxu0 %v199
    %575 = vmatpush.msra.mxu0 %v194
    %576 = vmatpush.msra.mxu0 %v189
    %577 = vmatpush.msra.mxu0 %v184
    %578 = vmatpush.msra.mxu0 %v179
    %579 = vmatpush.msra.mxu0 %v174
    %580 = vmatpush.msra.mxu0 %v169
    %581 = vmatpush.msra.mxu0 %v164
    %582 = vmatpush.msra.mxu0 %v159
    %583 = vmatpush.msra.mxu0 %v154
    %584 = vmatpush.msra.mxu0 %v149
    %585 = vmatpush.msra.mxu0 %v144
    %586 = vmatmul.f32.gmra.mxu0 %v59
    %v587 = vpop.f32.mrf.mxu0
    %v588 = vadd.f32 %v568, %v587
    %589 = vdwg.mxu0
    %590 = vmatpush.msra.mxu0 %v299
    %591 = vmatpush.msra.mxu0 %v294
    %592 = vmatpush.msra.mxu0 %v289
    %593 = vmatpush.msra.mxu0 %v284
    %594 = vmatpush.msra.mxu0 %v279
    %595 = vmatpush.msra.mxu0 %v274
    %596 = vmatpush.msra.mxu0 %v269
    %597 = vmatpush.msra.mxu0 %v264
    %598 = vmatpush.msra.mxu0 %v259
    %599 = vmatpush.msra.mxu0 %v254
    %600 = vmatpush.msra.mxu0 %v249
    %601 = vmatpush.msra.mxu0 %v244
    %602 = vmatpush.msra.mxu0 %v239
    %603 = vmatpush.msra.mxu0 %v234
    %604 = vmatpush.msra.mxu0 %v229
    %605 = vmatpush.msra.mxu0 %v224
    %606 = vmatmul.f32.gmra.mxu0 %v60
    %v607 = vpop.f32.mrf.mxu0
    %v608 = vadd.f32 %v588, %v607
    %609 = vdwg.mxu0
    %610 = vmatpush.msra.mxu0 %v379
    %611 = vmatpush.msra.mxu0 %v374
    %612 = vmatpush.msra.mxu0 %v369
    %613 = vmatpush.msra.mxu0 %v364
    %614 = vmatpush.msra.mxu0 %v359
    %615 = vmatpush.msra.mxu0 %v354
    %616 = vmatpush.msra.mxu0 %v349
    %617 = vmatpush.msra.mxu0 %v344
    %618 = vmatpush.msra.mxu0 %v339
    %619 = vmatpush.msra.mxu0 %v334
    %620 = vmatpush.msra.mxu0 %v329
    %621 = vmatpush.msra.mxu0 %v324
    %622 = vmatpush.msra.mxu0 %v319
    %623 = vmatpush.msra.mxu0 %v314
    %624 = vmatpush.msra.mxu0 %v309
    %625 = vmatpush.msra.mxu0 %v304
    %626 = vmatmul.f32.gmra.mxu0 %v61
    %v627 = vpop.f32.mrf.mxu0
    %v628 = vadd.f32 %v608, %v627
    %629 = vdwg.mxu0
    %630 = vmatpush.msra.mxu0 0.0
    %631 = vmatpush.msra.mxu0 0.0
    %632 = vmatpush.msra.mxu0 0.0
    %633 = vmatpush.msra.mxu0 0.0
    %634 = vmatpush.msra.mxu0 0.0
    %635 = vmatpush.msra.mxu0 0.0
    %636 = vmatpush.msra.mxu0 0.0
    %637 = vmatpush.msra.mxu0 0.0
    %638 = vmatpush.msra.mxu0 0.0
    %639 = vmatpush.msra.mxu0 %v439
    %640 = vmatpush.msra.mxu0 %v409
    %641 = vmatpush.msra.mxu0 %v404
    %642 = vmatpush.msra.mxu0 %v399
    %643 = vmatpush.msra.mxu0 %v394
    %644 = vmatpush.msra.mxu0 %v389
    %645 = vmatpush.msra.mxu0 %v384
    %646 = vmatmul.f32.gmra.mxu0 %v432
    %v647 = vpop.f32.mrf.mxu0
    %v648 = vadd.f32 %v628, %v647
    %649 = vdwg.mxu0
    %650 = vmatpush.msra.mxu0 %v140
    %651 = vmatpush.msra.mxu0 %v135
    %652 = vmatpush.msra.mxu0 %v130
    %653 = vmatpush.msra.mxu0 %v125
    %654 = vmatpush.msra.mxu0 %v120
    %655 = vmatpush.msra.mxu0 %v115
    %656 = vmatpush.msra.mxu0 %v110
    %657 = vmatpush.msra.mxu0 %v105
    %658 = vmatpush.msra.mxu0 %v100
    %659 = vmatpush.msra.mxu0 %v95
    %660 = vmatpush.msra.mxu0 %v90
    %661 = vmatpush.msra.mxu0 %v85
    %662 = vmatpush.msra.mxu0 %v80
    %663 = vmatpush.msra.mxu0 %v75
    %664 = vmatpush.msra.mxu0 %v70
    %665 = vmatpush.msra.mxu0 %v65
    %666 = vmatmul.f32.gmra.mxu0 %v58
    %v667 = vpop.f32.mrf.mxu0
    %v668 = vadd.f32 %v422, %v667
    %669 = vdwg.mxu0
    %670 = vmatpush.msra.mxu0 %v220
    %671 = vmatpush.msra.mxu0 %v215
    %672 = vmatpush.msra.mxu0 %v210
    %673 = vmatpush.msra.mxu0 %v205
    %674 = vmatpush.msra.mxu0 %v200
    %675 = vmatpush.msra.mxu0 %v195
    %676 = vmatpush.msra.mxu0 %v190
    %677 = vmatpush.msra.mxu0 %v185
    %678 = vmatpush.msra.mxu0 %v180
    %679 = vmatpush.msra.mxu0 %v175
    %680 = vmatpush.msra.mxu0 %v170
    %681 = vmatpush.msra.mxu0 %v165
    %682 = vmatpush.msra.mxu0 %v160
    %683 = vmatpush.msra.mxu0 %v155
    %684 = vmatpush.msra.mxu0 %v150
    %685 = vmatpush.msra.mxu0 %v145
    %686 = vmatmul.f32.gmra.mxu0 %v59
    %v687 = vpop.f32.mrf.mxu0
    %v688 = vadd.f32 %v668, %v687
    %689 = vdwg.mxu0
    %690 = vmatpush.msra.mxu0 %v300
    %691 = vmatpush.msra.mxu0 %v295
    %692 = vmatpush.msra.mxu0 %v290
    %693 = vmatpush.msra.mxu0 %v285
    %694 = vmatpush.msra.mxu0 %v280
    %695 = vmatpush.msra.mxu0 %v275
    %696 = vmatpush.msra.mxu0 %v270
    %697 = vmatpush.msra.mxu0 %v265
    %698 = vmatpush.msra.mxu0 %v260
    %699 = vmatpush.msra.mxu0 %v255
    %700 = vmatpush.msra.mxu0 %v250
    %701 = vmatpush.msra.mxu0 %v245
    %702 = vmatpush.msra.mxu0 %v240
    %703 = vmatpush.msra.mxu0 %v235
    %704 = vmatpush.msra.mxu0 %v230
    %705 = vmatpush.msra.mxu0 %v225
    %706 = vmatmul.f32.gmra.mxu0 %v60
    %v707 = vpop.f32.mrf.mxu0
    %v708 = vadd.f32 %v688, %v707
    %709 = vdwg.mxu0
    %710 = vmatpush.msra.mxu0 %v380
    %711 = vmatpush.msra.mxu0 %v375
    %712 = vmatpush.msra.mxu0 %v370
    %713 = vmatpush.msra.mxu0 %v365
    %714 = vmatpush.msra.mxu0 %v360
    %715 = vmatpush.msra.mxu0 %v355
    %716 = vmatpush.msra.mxu0 %v350
    %717 = vmatpush.msra.mxu0 %v345
    %718 = vmatpush.msra.mxu0 %v340
    %719 = vmatpush.msra.mxu0 %v335
    %720 = vmatpush.msra.mxu0 %v330
    %721 = vmatpush.msra.mxu0 %v325
    %722 = vmatpush.msra.mxu0 %v320
    %723 = vmatpush.msra.mxu0 %v315
    %724 = vmatpush.msra.mxu0 %v310
    %725 = vmatpush.msra.mxu0 %v305
    %726 = vmatmul.f32.gmra.mxu0 %v61
    %v727 = vpop.f32.mrf.mxu0
    %v728 = vadd.f32 %v708, %v727
    %729 = vdwg.mxu0
    %730 = vmatpush.msra.mxu0 0.0
    %731 = vmatpush.msra.mxu0 0.0
    %732 = vmatpush.msra.mxu0 0.0
    %733 = vmatpush.msra.mxu0 0.0
    %734 = vmatpush.msra.mxu0 0.0
    %735 = vmatpush.msra.mxu0 0.0
    %736 = vmatpush.msra.mxu0 0.0
    %737 = vmatpush.msra.mxu0 0.0
    %738 = vmatpush.msra.mxu0 0.0
    %739 = vmatpush.msra.mxu0 %v442
    %740 = vmatpush.msra.mxu0 %v410
    %741 = vmatpush.msra.mxu0 %v405
    %742 = vmatpush.msra.mxu0 %v400
    %743 = vmatpush.msra.mxu0 %v395
    %744 = vmatpush.msra.mxu0 %v390
    %745 = vmatpush.msra.mxu0 %v385
    %746 = vmatmul.f32.gmra.mxu0 %v432
    %v747 = vpop.f32.mrf.mxu0
    %v748 = vadd.f32 %v728, %v747
    %749 = vdwg.mxu0
    %750 = vmatpush.msra.mxu0 %v141
    %751 = vmatpush.msra.mxu0 %v136
    %752 = vmatpush.msra.mxu0 %v131
    %753 = vmatpush.msra.mxu0 %v126
    %754 = vmatpush.msra.mxu0 %v121
    %755 = vmatpush.msra.mxu0 %v116
    %756 = vmatpush.msra.mxu0 %v111
    %757 = vmatpush.msra.mxu0 %v106
    %758 = vmatpush.msra.mxu0 %v101
    %759 = vmatpush.msra.mxu0 %v96
    %760 = vmatpush.msra.mxu0 %v91
    %761 = vmatpush.msra.mxu0 %v86
    %762 = vmatpush.msra.mxu0 %v81
    %763 = vmatpush.msra.mxu0 %v76
    %764 = vmatpush.msra.mxu0 %v71
    %765 = vmatpush.msra.mxu0 %v66
    %766 = vmatmul.f32.gmra.mxu0 %v58
    %v767 = vpop.f32.mrf.mxu0
    %v768 = vadd.f32 %v423, %v767
    %769 = vdwg.mxu0
    %770 = vmatpush.msra.mxu0 %v221
    %771 = vmatpush.msra.mxu0 %v216
    %772 = vmatpush.msra.mxu0 %v211
    %773 = vmatpush.msra.mxu0 %v206
    %774 = vmatpush.msra.mxu0 %v201
    %775 = vmatpush.msra.mxu0 %v196
    %776 = vmatpush.msra.mxu0 %v191
    %777 = vmatpush.msra.mxu0 %v186
    %778 = vmatpush.msra.mxu0 %v181
    %779 = vmatpush.msra.mxu0 %v176
    %780 = vmatpush.msra.mxu0 %v171
    %781 = vmatpush.msra.mxu0 %v166
    %782 = vmatpush.msra.mxu0 %v161
    %783 = vmatpush.msra.mxu0 %v156
    %784 = vmatpush.msra.mxu0 %v151
    %785 = vmatpush.msra.mxu0 %v146
    %786 = vmatmul.f32.gmra.mxu0 %v59
    %v787 = vpop.f32.mrf.mxu0
    %v788 = vadd.f32 %v768, %v787
    %789 = vdwg.mxu0
    %790 = vmatpush.msra.mxu0 %v301
    %791 = vmatpush.msra.mxu0 %v296
    %792 = vmatpush.msra.mxu0 %v291
    %793 = vmatpush.msra.mxu0 %v286
    %794 = vmatpush.msra.mxu0 %v281
    %795 = vmatpush.msra.mxu0 %v276
    %796 = vmatpush.msra.mxu0 %v271
    %797 = vmatpush.msra.mxu0 %v266
    %798 = vmatpush.msra.mxu0 %v261
    %799 = vmatpush.msra.mxu0 %v256
    %800 = vmatpush.msra.mxu0 %v251
    %801 = vmatpush.msra.mxu0 %v246
    %802 = vmatpush.msra.mxu0 %v241
    %803 = vmatpush.msra.mxu0 %v236
    %804 = vmatpush.msra.mxu0 %v231
    %805 = vmatpush.msra.mxu0 %v226
    %806 = vmatmul.f32.gmra.mxu0 %v60
    %v807 = vpop.f32.mrf.mxu0
    %v808 = vadd.f32 %v788, %v807
    %809 = vdwg.mxu0
    %810 = vmatpush.msra.mxu0 %v381
    %811 = vmatpush.msra.mxu0 %v376
    %812 = vmatpush.msra.mxu0 %v371
    %813 = vmatpush.msra.mxu0 %v366
    %814 = vmatpush.msra.mxu0 %v361
    %815 = vmatpush.msra.mxu0 %v356
    %816 = vmatpush.msra.mxu0 %v351
    %817 = vmatpush.msra.mxu0 %v346
    %818 = vmatpush.msra.mxu0 %v341
    %819 = vmatpush.msra.mxu0 %v336
    %820 = vmatpush.msra.mxu0 %v331
    %821 = vmatpush.msra.mxu0 %v326
    %822 = vmatpush.msra.mxu0 %v321
    %823 = vmatpush.msra.mxu0 %v316
    %824 = vmatpush.msra.mxu0 %v311
    %825 = vmatpush.msra.mxu0 %v306
    %826 = vmatmul.f32.gmra.mxu0 %v61
    %v827 = vpop.f32.mrf.mxu0
    %v828 = vadd.f32 %v808, %v827
    %829 = vdwg.mxu0
    %830 = vmatpush.msra.mxu0 0.0
    %831 = vmatpush.msra.mxu0 0.0
    %832 = vmatpush.msra.mxu0 0.0
    %833 = vmatpush.msra.mxu0 0.0
    %834 = vmatpush.msra.mxu0 0.0
    %835 = vmatpush.msra.mxu0 0.0
    %836 = vmatpush.msra.mxu0 0.0
    %837 = vmatpush.msra.mxu0 0.0
    %838 = vmatpush.msra.mxu0 0.0
    %839 = vmatpush.msra.mxu0 %v445
    %840 = vmatpush.msra.mxu0 %v411
    %841 = vmatpush.msra.mxu0 %v406
    %842 = vmatpush.msra.mxu0 %v401
    %843 = vmatpush.msra.mxu0 %v396
    %844 = vmatpush.msra.mxu0 %v391
    %845 = vmatpush.msra.mxu0 %v386
    %846 = vmatmul.f32.gmra.mxu0 %v432
    %v847 = vpop.f32.mrf.mxu0
    %v848 = vadd.f32 %v828, %v847
    %849 = vdwg.mxu0
    %850 = vmatpush.msra.mxu0 %v142
    %851 = vmatpush.msra.mxu0 %v137
    %852 = vmatpush.msra.mxu0 %v132
    %853 = vmatpush.msra.mxu0 %v127
    %854 = vmatpush.msra.mxu0 %v122
    %855 = vmatpush.msra.mxu0 %v117
    %856 = vmatpush.msra.mxu0 %v112
    %857 = vmatpush.msra.mxu0 %v107
    %858 = vmatpush.msra.mxu0 %v102
    %859 = vmatpush.msra.mxu0 %v97
    %860 = vmatpush.msra.mxu0 %v92
    %861 = vmatpush.msra.mxu0 %v87
    %862 = vmatpush.msra.mxu0 %v82
    %863 = vmatpush.msra.mxu0 %v77
    %864 = vmatpush.msra.mxu0 %v72
    %865 = vmatpush.msra.mxu0 %v67
    %866 = vmatmul.f32.gmra.mxu0 %v58
    %v867 = vpop.f32.mrf.mxu0
    %v868 = vadd.f32 %v424, %v867
    %869 = vdwg.mxu0
    %870 = vmatpush.msra.mxu0 %v222
    %871 = vmatpush.msra.mxu0 %v217
    %872 = vmatpush.msra.mxu0 %v212
    %873 = vmatpush.msra.mxu0 %v207
    %874 = vmatpush.msra.mxu0 %v202
    %875 = vmatpush.msra.mxu0 %v197
    %876 = vmatpush.msra.mxu0 %v192
    %877 = vmatpush.msra.mxu0 %v187
    %878 = vmatpush.msra.mxu0 %v182
    %879 = vmatpush.msra.mxu0 %v177
    %880 = vmatpush.msra.mxu0 %v172
    %881 = vmatpush.msra.mxu0 %v167
    %882 = vmatpush.msra.mxu0 %v162
    %883 = vmatpush.msra.mxu0 %v157
    %884 = vmatpush.msra.mxu0 %v152
    %885 = vmatpush.msra.mxu0 %v147
    %886 = vmatmul.f32.gmra.mxu0 %v59
    %v887 = vpop.f32.mrf.mxu0
    %v888 = vadd.f32 %v868, %v887
    %889 = vdwg.mxu0
    %890 = vmatpush.msra.mxu0 %v302
    %891 = vmatpush.msra.mxu0 %v297
    %892 = vmatpush.msra.mxu0 %v292
    %893 = vmatpush.msra.mxu0 %v287
    %894 = vmatpush.msra.mxu0 %v282
    %895 = vmatpush.msra.mxu0 %v277
    %896 = vmatpush.msra.mxu0 %v272
    %897 = vmatpush.msra.mxu0 %v267
    %898 = vmatpush.msra.mxu0 %v262
    %899 = vmatpush.msra.mxu0 %v257
    %900 = vmatpush.msra.mxu0 %v252
    %901 = vmatpush.msra.mxu0 %v247
    %902 = vmatpush.msra.mxu0 %v242
    %903 = vmatpush.msra.mxu0 %v237
    %904 = vmatpush.msra.mxu0 %v232
    %905 = vmatpush.msra.mxu0 %v227
    %906 = vmatmul.f32.gmra.mxu0 %v60
    %v907 = vpop.f32.mrf.mxu0
    %v908 = vadd.f32 %v888, %v907
    %909 = vdwg.mxu0
    %910 = vmatpush.msra.mxu0 %v382
    %911 = vmatpush.msra.mxu0 %v377
    %912 = vmatpush.msra.mxu0 %v372
    %913 = vmatpush.msra.mxu0 %v367
    %914 = vmatpush.msra.mxu0 %v362
    %915 = vmatpush.msra.mxu0 %v357
    %916 = vmatpush.msra.mxu0 %v352
    %917 = vmatpush.msra.mxu0 %v347
    %918 = vmatpush.msra.mxu0 %v342
    %919 = vmatpush.msra.mxu0 %v337
    %920 = vmatpush.msra.mxu0 %v332
    %921 = vmatpush.msra.mxu0 %v327
    %922 = vmatpush.msra.mxu0 %v322
    %923 = vmatpush.msra.mxu0 %v317
    %924 = vmatpush.msra.mxu0 %v312
    %925 = vmatpush.msra.mxu0 %v307
    %926 = vmatmul.f32.gmra.mxu0 %v61
    %v927 = vpop.f32.mrf.mxu0
    %v928 = vadd.f32 %v908, %v927
    %929 = vdwg.mxu0
    %930 = vmatpush.msra.mxu0 0.0
    %931 = vmatpush.msra.mxu0 0.0
    %932 = vmatpush.msra.mxu0 0.0
    %933 = vmatpush.msra.mxu0 0.0
    %934 = vmatpush.msra.mxu0 0.0
    %935 = vmatpush.msra.mxu0 0.0
    %936 = vmatpush.msra.mxu0 0.0
    %937 = vmatpush.msra.mxu0 0.0
    %938 = vmatpush.msra.mxu0 0.0
    %939 = vmatpush.msra.mxu0 %v448
    %940 = vmatpush.msra.mxu0 %v412
    %941 = vmatpush.msra.mxu0 %v407
    %942 = vmatpush.msra.mxu0 %v402
    %943 = vmatpush.msra.mxu0 %v397
    %944 = vmatpush.msra.mxu0 %v392
    %945 = vmatpush.msra.mxu0 %v387
    %946 = vmatmul.f32.gmra.mxu0 %v432
    %v947 = vpop.f32.mrf.mxu0
    %v948 = vadd.f32 %v928, %v947
    %949 = vdwg.mxu0
    %950 = vst [vmem:[#allocation8] sm:$0xff] %v548
    %951 = vst [vmem:[#allocation8 + $0x8] sm:$0xff] %v648
    %952 = vst [vmem:[#allocation8 + $0x10] sm:$0xff] %v748
    %953 = vst [vmem:[#allocation8 + $0x18] sm:$0xff] %v848
    %954 = vst.msk [vmem:[#allocation8 + $0x20] sm:$0xff] %vm430, %v948
    // Predicated region
    $region26: #{mae_forward.1} parent=1 // pred_check
      _
    $region27: #{mae_forward.1} parent=1 // pred_check_branch
      %956 = sbr.rel (0) target = $region29
    $region28: #{mae_forward.1} parent=1 // pred_region
      %958 = vsyncadd [#allocation4], 0
      %s960 = sshll.u32 [#allocation8], 4
      %s961 = int_to_ptr.vmem [resolvable:$true] %s960
      %s962 = sshll.u32 %s3, 4
      %s963 = int_to_ptr.hbm [resolvable:$true] %s962
      %965 = dma.vmem_to_hbm [thread:$0]  %s961, 640, %s963, [#allocation4]
    $region29: #{mae_forward.1} parent=1 // pred_fallthru
      _
    // Predicated region
    $region30: #{mae_forward.1} parent=1 // pred_check
      _
    $region31: #{mae_forward.1} parent=1 // pred_check_branch
      %967 = sbr.rel (0) target = $region33
    $region32: #{mae_forward.1} parent=1 // pred_region
      %969 = dma.done [#allocation4], 640
    $region33: #{mae_forward.1} parent=1 // pred_fallthru
      _
    %970 = vsyncpa [#allocation3], 1
    %971 = vsyncpa [#allocation6], 1
    %972 = vsyncpa [#allocation4], 1

</llo_original>
